<compile_context>
chip_gen: v6e
topology: v6e:2x2x1
jax: 0.10.0
libtpu: 0.0.40
codegen_flags: <defaults>
</compile_context>

<pallas_src>
import jax
import jax.numpy as jnp
from jax.experimental import pallas as pl
from jax.experimental.pallas import tpu as pltpu

_DEFAULT_BATCH_TILE = 2048


def a2c_actor_kernel(x_ref, w1_ref, b1_ref, w2_ref, b2_ref, out_ref):
    # fc1: cast f32 activations to bf16 on the VPU (free), MXU matmul with f32
    # accumulate, then bias + ReLU in f32.
    x = x_ref[...].astype(jnp.bfloat16)
    h = jnp.dot(x, w1_ref[...], preferred_element_type=jnp.float32)
    h = jnp.maximum(h + b1_ref[...], 0.0)

    # fc2: narrow (H, A) weights -- MXU pads internally; only A real lanes.
    logits = jnp.dot(h.astype(jnp.bfloat16), w2_ref[...],
                     preferred_element_type=jnp.float32)
    logits = logits + b2_ref[...]

    # numerically stable softmax over the real action axis only.
    m = jnp.max(logits, axis=-1, keepdims=True)
    e = jnp.exp(logits - m)
    denom = jnp.sum(e, axis=-1, keepdims=True)
    out_ref[...] = (e * pl.reciprocal(denom, approx=True)).astype(out_ref.dtype)


def prepare_params(w1, b1, w2, b2):
    """One-time parameter prep (call once, reuse across forward calls).

    Hoists the bf16 weight casts and 2-D bias reshapes off the hot path so the
    pallas_call is the only per-call op.
    """
    w1_bf = w1.astype(jnp.bfloat16)
    w2_bf = w2.astype(jnp.bfloat16)
    b1_2d = b1.reshape(1, -1).astype(jnp.float32)
    b2_2d = b2.reshape(1, -1).astype(jnp.float32)
    return w1_bf, b1_2d, w2_bf, b2_2d


def a2c_actor_forward(state, w1_bf, b1_2d, w2_bf, b2_2d,
                      *, batch_tile=_DEFAULT_BATCH_TILE):
    """state: (B, num_inputs) f32; returns action distribution (B, num_actions) f32.

    Weights must come from prepare_params().
    """
    B, K = state.shape
    H = w1_bf.shape[1]
    A = w2_bf.shape[1]

    # ---- batch tiling: sublane-aligned, and >= 2 grid steps when the batch is
    # big enough so v7x's two TensorCores both get work (no-op on v5e/v6e). ----
    B8 = pl.cdiv(B, 8) * 8
    if B8 >= 32:
        half = pl.cdiv(pl.cdiv(B8, 2), 16) * 16   # ~half the batch, 16-aligned
        TB = min(batch_tile, half)
    else:
        TB = B8
    B_pad = pl.cdiv(B8, TB) * TB

    x = state
    if B_pad != B:
        x = jnp.zeros((B_pad, K), state.dtype).at[:B].set(state)

    grid = (B_pad // TB,)
    out = pl.pallas_call(
        a2c_actor_kernel,
        out_shape=jax.ShapeDtypeStruct((B_pad, A), jnp.float32),
        grid_spec=pltpu.PrefetchScalarGridSpec(
            num_scalar_prefetch=0,
            grid=grid,
            in_specs=[
                # only the activation stream is tiled over the batch axis
                pl.BlockSpec((TB, K), lambda i: (i, 0)),
                # weights / biases: constant index_map -> fetched once,
                # VMEM-resident across all batch tiles
                pl.BlockSpec((K, H), lambda i: (0, 0)),
                pl.BlockSpec((1, H), lambda i: (0, 0)),
                pl.BlockSpec((H, A), lambda i: (0, 0)),
                pl.BlockSpec((1, A), lambda i: (0, 0)),
            ],
            # narrow, un-padded output: only the real A action columns hit HBM
            out_specs=pl.BlockSpec((TB, A), lambda i: (i, 0)),
        ),
        compiler_params=pltpu.CompilerParams(
            # batch tiles are independent -> shard across v7x's two TCs
            dimension_semantics=("parallel",)),
    )(x, w1_bf, b1_2d, w2_bf, b2_2d)

    # strip batch padding only (no lane padding to strip anymore)
    return out if B_pad == B else out[:B]


def init_params(key, num_inputs, num_actions, hidden_size):
    """Deterministic PyTorch-style Linear init (uniform +/- 1/sqrt(fan_in))."""
    k1, k2, k3, k4 = jax.random.split(key, 4)
    lim1 = 1.0 / jnp.sqrt(num_inputs)
    lim2 = 1.0 / jnp.sqrt(hidden_size)
    w1 = jax.random.uniform(k1, (num_inputs, hidden_size), jnp.float32, -lim1, lim1)
    b1 = jax.random.uniform(k2, (hidden_size,), jnp.float32, -lim1, lim1)
    w2 = jax.random.uniform(k3, (hidden_size, num_actions), jnp.float32, -lim2, lim2)
    b2 = jax.random.uniform(k4, (num_actions,), jnp.float32, -lim2, lim2)
    return w1, b1, w2, b2


if __name__ == "__main__":
    num_inputs, num_actions, hidden_size = 16, 8, 32
    batch = 2

    key = jax.random.PRNGKey(0)
    k_state, k_params = jax.random.split(key)
    state = jax.random.normal(k_state, (batch, num_inputs), jnp.float32)
    w1, b1, w2, b2 = init_params(k_params, num_inputs, num_actions, hidden_size)

    # one-time weight prep (off the hot path), then the pallas_call forward
    params = prepare_params(w1, b1, w2, b2)
    action_dist = a2c_actor_forward(state, *params)
    action_dist = jax.block_until_ready(action_dist)

    # reference in plain JAX, matching the kernel's bf16 matmul / f32 accumulate
    s_bf, w1_bf, w2_bf = (a.astype(jnp.bfloat16) for a in (state, w1, w2))
    h_ref = jnp.maximum(
        jnp.dot(s_bf, w1_bf, preferred_element_type=jnp.float32) + b1, 0.0)
    logits_ref = jnp.dot(h_ref.astype(jnp.bfloat16), w2_bf,
                         preferred_element_type=jnp.float32) + b2
    ref = jax.nn.softmax(logits_ref, axis=-1)

    assert action_dist.shape == (batch, num_actions)
    assert jnp.allclose(action_dist, ref, atol=2e-3, rtol=2e-3)
    assert jnp.allclose(jnp.sum(action_dist, axis=-1), 1.0, atol=1e-3)

    # TODO(synk): if the matching A2C critic is also ported, fuse both heads
    # into one pallas_call so they share the state DMA and launch overhead.

    print("KERNEL_OK")
</pallas_src>

<mosaic_0001>
module attributes {stable_mosaic.version = 11 : i64} {
  func.func @a2c_actor_kernel(%arg0: i32, %arg1: memref<8x16xf32, #tpu.memory_space<vmem>>, %arg2: memref<16x32xbf16, #tpu.memory_space<vmem>>, %arg3: memref<1x32xf32, #tpu.memory_space<vmem>>, %arg4: memref<32x8xbf16, #tpu.memory_space<vmem>>, %arg5: memref<1x8xf32, #tpu.memory_space<vmem>>, %arg6: memref<8x8xf32, #tpu.memory_space<vmem>>) attributes {dimension_semantics = [#tpu.dimension_semantics<parallel>], iteration_bounds = array<i64: 1>, scalar_prefetch = 0 : i64, scratch_operands = 0 : i64, tpu.core_type = #tpu.core_type<tc>, window_params = [{transform_indices = @transform_0, window_bounds = array<i64: 8, 16>}, {pipeline_mode = #tpu.pipeline_mode<synchronous>, transform_indices = @transform_1, window_bounds = array<i64: 16, 32>}, {pipeline_mode = #tpu.pipeline_mode<synchronous>, transform_indices = @transform_2, window_bounds = array<i64: 1, 32>}, {pipeline_mode = #tpu.pipeline_mode<synchronous>, transform_indices = @transform_3, window_bounds = array<i64: 32, 8>}, {pipeline_mode = #tpu.pipeline_mode<synchronous>, transform_indices = @transform_4, window_bounds = array<i64: 1, 8>}, {transform_indices = @transform_5, window_bounds = array<i64: 8, 8>}]} {
    %c0 = arith.constant 0 : index
    %c0_0 = arith.constant 0 : index
    %0 = vector.load %arg1[%c0, %c0_0] : memref<8x16xf32, #tpu.memory_space<vmem>>, vector<8x16xf32>
    %1 = arith.truncf %0 : vector<8x16xf32> to vector<8x16xbf16>
    %c0_1 = arith.constant 0 : index
    %c0_2 = arith.constant 0 : index
    %2 = vector.load %arg2[%c0_1, %c0_2] : memref<16x32xbf16, #tpu.memory_space<vmem>>, vector<16x32xbf16>
    %cst = arith.constant dense<0.000000e+00> : vector<8x32xf32>
    %3 = tpu.matmul %1, %2, %cst {dimension_numbers = #tpu.dot_dimension_numbers<[1], [0], [0], [1], [0, 0, 1, 1], [], []>} : vector<8x16xbf16>, vector<16x32xbf16>, vector<8x32xf32> -> vector<8x32xf32>
    %c0_3 = arith.constant 0 : index
    %c0_4 = arith.constant 0 : index
    %4 = vector.load %arg3[%c0_3, %c0_4] : memref<1x32xf32, #tpu.memory_space<vmem>>, vector<1x32xf32>
    %5 = vector.broadcast %4 : vector<1x32xf32> to vector<8x32xf32>
    %6 = arith.addf %3, %5 : vector<8x32xf32>
    %cst_5 = arith.constant 0.000000e+00 : f32
    %7 = vector.broadcast %cst_5 : f32 to vector<8x32xf32>
    %8 = arith.maximumf %6, %7 : vector<8x32xf32>
    %9 = arith.truncf %8 : vector<8x32xf32> to vector<8x32xbf16>
    %c0_6 = arith.constant 0 : index
    %c0_7 = arith.constant 0 : index
    %10 = vector.load %arg4[%c0_6, %c0_7] : memref<32x8xbf16, #tpu.memory_space<vmem>>, vector<32x8xbf16>
    %cst_8 = arith.constant dense<0.000000e+00> : vector<8x8xf32>
    %11 = tpu.matmul %9, %10, %cst_8 {dimension_numbers = #tpu.dot_dimension_numbers<[1], [0], [0], [1], [0, 0, 1, 1], [], []>} : vector<8x32xbf16>, vector<32x8xbf16>, vector<8x8xf32> -> vector<8x8xf32>
    %c0_9 = arith.constant 0 : index
    %c0_10 = arith.constant 0 : index
    %12 = vector.load %arg5[%c0_9, %c0_10] : memref<1x8xf32, #tpu.memory_space<vmem>>, vector<1x8xf32>
    %13 = vector.broadcast %12 : vector<1x8xf32> to vector<8x8xf32>
    %14 = arith.addf %11, %13 : vector<8x8xf32>
    %cst_11 = arith.constant dense<0xFF800000> : vector<8xf32>
    %15 = vector.multi_reduction <maximumf>, %14, %cst_11 [1] : vector<8x8xf32> to vector<8xf32>
    %16 = vector.shape_cast %15 : vector<8xf32> to vector<8x1xf32>
    %17 = vector.broadcast %16 : vector<8x1xf32> to vector<8x8xf32>
    %18 = arith.subf %14, %17 : vector<8x8xf32>
    %19 = math.exp %18 : vector<8x8xf32>
    %cst_12 = arith.constant dense<0.000000e+00> : vector<8xf32>
    %20 = vector.multi_reduction <add>, %19, %cst_12 [1] : vector<8x8xf32> to vector<8xf32>
    %21 = vector.shape_cast %20 : vector<8xf32> to vector<8x1xf32>
    %22 = tpu.reciprocal %21 {approx = true} : vector<8x1xf32> -> vector<8x1xf32>
    %23 = vector.broadcast %22 : vector<8x1xf32> to vector<8x8xf32>
    %24 = arith.mulf %19, %23 : vector<8x8xf32>
    %c0_13 = arith.constant 0 : index
    %c0_14 = arith.constant 0 : index
    %25 = vector.load %arg6[%c0_13, %c0_14] : memref<8x8xf32, #tpu.memory_space<vmem>>, vector<8x8xf32>
    tpu.vector_store %arg6[%c0_13, %c0_14], %24 {strides = array<i32>} : memref<8x8xf32, #tpu.memory_space<vmem>>, vector<8x8xf32>,
    return
  }
  func.func @transform_0(%arg0: i32) -> (i32, i32) {
    %c0_i32 = arith.constant 0 : i32
    %c0_i32_0 = arith.constant 0 : i32
    return %arg0, %c0_i32 : i32, i32
  }
  func.func @transform_1(%arg0: i32) -> (i32, i32) {
    %c0_i32 = arith.constant 0 : i32
    %c0_i32_0 = arith.constant 0 : i32
    %c0_i32_1 = arith.constant 0 : i32
    return %c0_i32, %c0_i32_0 : i32, i32
  }
  func.func @transform_2(%arg0: i32) -> (i32, i32) {
    %c0_i32 = arith.constant 0 : i32
    %c0_i32_0 = arith.constant 0 : i32
    %c0_i32_1 = arith.constant 0 : i32
    return %c0_i32, %c0_i32_0 : i32, i32
  }
  func.func @transform_3(%arg0: i32) -> (i32, i32) {
    %c0_i32 = arith.constant 0 : i32
    %c0_i32_0 = arith.constant 0 : i32
    %c0_i32_1 = arith.constant 0 : i32
    return %c0_i32, %c0_i32_0 : i32, i32
  }
  func.func @transform_4(%arg0: i32) -> (i32, i32) {
    %c0_i32 = arith.constant 0 : i32
    %c0_i32_0 = arith.constant 0 : i32
    %c0_i32_1 = arith.constant 0 : i32
    return %c0_i32, %c0_i32_0 : i32, i32
  }
  func.func @transform_5(%arg0: i32) -> (i32, i32) {
    %c0_i32 = arith.constant 0 : i32
    %c0_i32_0 = arith.constant 0 : i32
    return %arg0, %c0_i32 : i32, i32
  }
}

</mosaic_0001>

<llo_original>
// kernel: tpu_custom_call.1
$region0: #{tpu_custom_call.1}
  #allocation0 [shape = 'u32[]', space=smem, size = 0x4, offset = 0x4, fixed_abs, tag = 'smem constant byte address 0x4 - core index']
  #allocation1 [shape = 'u32[144,128]{1,0:T(1,128)}', space=vmem, size = 0x12000, scoped, tag = 'internal scratch']
  %s0 = inlined_call_operand.vmem [shape: f32[8,16], index: 0, kind: input, shape index: {}]
  %s1 = inlined_call_operand.vmem [shape: bf16[16,32], index: 1, kind: input, shape index: {}]
  %s2 = inlined_call_operand.vmem [shape: f32[1,32], index: 2, kind: input, shape index: {}]
  %s3 = inlined_call_operand.vmem [shape: bf16[32,8], index: 3, kind: input, shape index: {}]
  %s4 = inlined_call_operand.vmem [shape: f32[1,8], index: 4, kind: input, shape index: {}]
  %s5 = inlined_call_operand.hbm [shape: f32[8,8], index: 5, kind: output, shape index: {}]
  %s6 = sld [smem:[#allocation0]]
  $region30: #{tpu_custom_call.1} parent=0
    _
  %s8 = ssub.s32 1, %s6
  %s9 = scalar_select 0, %s8, %s6
  $region1: #{tpu_custom_call.1} parent=0
    #allocation2 [shape = 'u8[4096]{0}', space=vmem, size = 0x1000, scoped, tag = 'output window, operand 0, single buffered']
    #allocation3 [shape = 's32[1]{0}', space=sflag, size = 0x4, scoped, tag = 'scoped memory for tpu_custom_call.1']
    %10 = vsyncpa [#allocation3], 0
    // Predicated region
    $region2: #{tpu_custom_call.1} parent=1 // pred_check
      _
    $region3: #{tpu_custom_call.1} parent=1 // pred_check_branch
      %12 = sbr.rel (0) target = $region5
    $region4: #{tpu_custom_call.1} parent=1 // pred_region
      _
    $region5: #{tpu_custom_call.1} parent=1 // pred_fallthru
      _
    // Predicated region
    $region6: #{tpu_custom_call.1} parent=1 // pred_check
      _
    $region7: #{tpu_custom_call.1} parent=1 // pred_check_branch
      %14 = sbr.rel (0) target = $region9
    $region8: #{tpu_custom_call.1} parent=1 // pred_region
      _
    $region9: #{tpu_custom_call.1} parent=1 // pred_fallthru
      _
    // Predicated region
    $region10: #{tpu_custom_call.1} parent=1 // pred_check
      _
    $region11: #{tpu_custom_call.1} parent=1 // pred_check_branch
      %16 = sbr.rel (0) target = $region13
    $region12: #{tpu_custom_call.1} parent=1 // pred_region
      _
    $region13: #{tpu_custom_call.1} parent=1 // pred_fallthru
      _
    // Predicated region
    $region14: #{tpu_custom_call.1} parent=1 // pred_check
      _
    $region15: #{tpu_custom_call.1} parent=1 // pred_check_branch
      %18 = sbr.rel (0) target = $region17
    $region16: #{tpu_custom_call.1} parent=1 // pred_region
      _
    $region17: #{tpu_custom_call.1} parent=1 // pred_fallthru
      _
    // Predicated region
    $region18: #{tpu_custom_call.1} parent=1 // pred_check
      _
    $region19: #{tpu_custom_call.1} parent=1 // pred_check_branch
      %20 = sbr.rel (0) target = $region21
    $region20: #{tpu_custom_call.1} parent=1 // pred_region
      _
    $region21: #{tpu_custom_call.1} parent=1 // pred_fallthru
      _
    %v22 = vld [vmem:[%s0] sm:$0xff]
    %v23 = vpack.c.bf16 %v22, %v22
    %v24 = vld [vmem:[%s1] sm:$0xf]
    %v25 = vld [vmem:[%s1 + $0x4] sm:$0xf]
    %v26 = vld [vmem:[%s2] sm:$0x1]
    %v28 = vlaneseq
    %v29 = vshrl.u32 %v28, 7
    %v30 = vsub.s32 0, %v29
    %v31 = vrot.slane %v26, %v30
    %v35 = vunpack.c.l.b16 %v24
    %v36 = vunpack.c.l.b16 %v25
    %v37 = vpack.c.b16 %v36, %v35
    %vm39 = vcmask 130048
    %v41 = vsel %vm39, %v23, 0
    %43 = vmatprep.subr.bf16.mxu0 0
    %44 = vmatpush1.bf16.msra.mxu0 0
    %45 = vmatprep.subr.bf16.mxu0 0
    %46 = vmatpush1.bf16.msra.mxu0 0
    %47 = vmatprep.subr.bf16.mxu0 0
    %48 = vmatpush1.bf16.msra.mxu0 0
    %49 = vmatprep.subr.bf16.mxu0 0
    %50 = vmatpush1.bf16.msra.mxu0 0
    %51 = vmatprep.subr.bf16.mxu0 0
    %52 = vmatpush1.bf16.msra.mxu0 0
    %53 = vmatprep.subr.bf16.mxu0 0
    %54 = vmatpush1.bf16.msra.mxu0 0
    %55 = vmatprep.subr.bf16.mxu0 0
    %56 = vmatpush1.bf16.msra.mxu0 0
    %57 = vmatprep.subr.bf16.mxu0 0
    %58 = vmatpush1.bf16.msra.mxu0 %v37
    %59 = vmatprep.subr.bf16.mxu0 0
    %60 = vmatpush2.bf16.msra.mxu0 0
    %61 = vmatprep.subr.bf16.mxu0 0
    %62 = vmatpush2.bf16.msra.mxu0 0
    %63 = vmatprep.subr.bf16.mxu0 0
    %64 = vmatpush2.bf16.msra.mxu0 0
    %65 = vmatprep.subr.bf16.mxu0 0
    %66 = vmatpush2.bf16.msra.mxu0 0
    %67 = vmatprep.subr.bf16.mxu0 0
    %68 = vmatpush2.bf16.msra.mxu0 0
    %69 = vmatprep.subr.bf16.mxu0 0
    %70 = vmatpush2.bf16.msra.mxu0 0
    %71 = vmatprep.subr.bf16.mxu0 0
    %72 = vmatpush2.bf16.msra.mxu0 0
    %73 = vmatprep.subr.bf16.mxu0 0
    %74 = vmatpush2.bf16.msra.mxu0 0
    %75 = vmatprep.mubr.bf16.mxu0 0
    %76 = vmatmul.mubr.bf16.gmra.mxu0 %v41
    %v77 = vpop.f32.mrf.mxu0
    %v78 = vadd.f32 %v31, %v77
    %v79 = vpop.f32.mrf.mxu0
    %v80 = vpop.f32.mrf.mxu0
    %v81 = vpop.f32.mrf.mxu0
    %82 = vdwg.mxu0
    %v83 = vmax.f32 %v78, 0.0
    %v84 = vpack.c.bf16 %v83, %v83
    %v85 = vld [vmem:[%s3] sm:$0xf]
    %v86 = vld [vmem:[%s3 + $0x4] sm:$0xf]
    %v87 = vld [vmem:[%s3 + $0x8] sm:$0xf]
    %v88 = vld [vmem:[%s3 + $0xc] sm:$0xf]
    %v89 = vld [vmem:[%s4] sm:$0x1]
    %v91 = vlaneseq
    %v92 = vshrl.u32 %v91, 7
    %v93 = vsub.s32 0, %v92
    %v94 = vrot.slane %v89, %v93
    %v100 = vunpack.c.l.b16 %v85
    %v101 = vunpack.c.l.b16 %v86
    %v102 = vunpack.c.l.b16 %v87
    %v103 = vunpack.c.l.b16 %v88
    %v104 = vpack.c.b16 %v101, %v100
    %v105 = vpack.c.b16 %v103, %v102
    %vm108 = vcmask 261120
    %v110 = vsel %vm108, %v84, 0
    %112 = vmatprep.subr.bf16.mxu0 0
    %113 = vmatpush1.bf16.msra.mxu0 0
    %114 = vmatprep.subr.bf16.mxu0 0
    %115 = vmatpush1.bf16.msra.mxu0 0
    %116 = vmatprep.subr.bf16.mxu0 0
    %117 = vmatpush1.bf16.msra.mxu0 0
    %118 = vmatprep.subr.bf16.mxu0 0
    %119 = vmatpush1.bf16.msra.mxu0 0
    %120 = vmatprep.subr.bf16.mxu0 0
    %121 = vmatpush1.bf16.msra.mxu0 0
    %122 = vmatprep.subr.bf16.mxu0 0
    %123 = vmatpush1.bf16.msra.mxu0 0
    %124 = vmatprep.subr.bf16.mxu0 0
    %125 = vmatpush1.bf16.msra.mxu0 %v105
    %126 = vmatprep.subr.bf16.mxu0 0
    %127 = vmatpush1.bf16.msra.mxu0 %v104
    %128 = vmatprep.subr.bf16.mxu0 0
    %129 = vmatpush2.bf16.msra.mxu0 0
    %130 = vmatprep.subr.bf16.mxu0 0
    %131 = vmatpush2.bf16.msra.mxu0 0
    %132 = vmatprep.subr.bf16.mxu0 0
    %133 = vmatpush2.bf16.msra.mxu0 0
    %134 = vmatprep.subr.bf16.mxu0 0
    %135 = vmatpush2.bf16.msra.mxu0 0
    %136 = vmatprep.subr.bf16.mxu0 0
    %137 = vmatpush2.bf16.msra.mxu0 0
    %138 = vmatprep.subr.bf16.mxu0 0
    %139 = vmatpush2.bf16.msra.mxu0 0
    %140 = vmatprep.subr.bf16.mxu0 0
    %141 = vmatpush2.bf16.msra.mxu0 0
    %142 = vmatprep.subr.bf16.mxu0 0
    %143 = vmatpush2.bf16.msra.mxu0 0
    %144 = vmatprep.mubr.bf16.mxu0 0
    %145 = vmatmul.mubr.bf16.gmra.mxu0 %v110
    %v146 = vpop.f32.mrf.mxu0
    %v147 = vadd.f32 %v94, %v146
    %v148 = vpop.f32.mrf.mxu0
    %v149 = vpop.f32.mrf.mxu0
    %v150 = vpop.f32.mrf.mxu0
    %151 = vdwg.mxu0
    %vm152 = vcmask 64512
    %v153 = vsel %vm152, %v147, -inf
    %154 = vmax.xlane.f32.xlu0 %v153
    %v155 = vpop.xlane.xlu0 %154
    %v156 = vsub.f32 %v147, %v155
    %v157 = vmul.f32 %v156, 1.442695
    %v158 = vpow.pop %v157
    %v159 = vsel %vm152, %v158, 0.0
    %160 = vadd.xlane.f32.xlu0 %v159
    %v161 = vpop.xlane.xlu0 %160
    %v162 = vrcp.pop %v161
    %v163 = vmul.f32 %v158, %v162
    %164 = vst.msk [vmem:[#allocation2] sm:$0xff] %vm152, %v163
    // Predicated region
    $region22: #{tpu_custom_call.1} parent=1 // pred_check
      _
    $region23: #{tpu_custom_call.1} parent=1 // pred_check_branch
      %166 = sbr.rel (0) target = $region25
    $region24: #{tpu_custom_call.1} parent=1 // pred_region
      %s168 = ssub.s32 128, 128
      %169 = vsyncadd [#allocation3], %s168
      %s171 = sshll.u32 [#allocation2], 4
      %s172 = int_to_ptr.vmem [resolvable:$true] %s171
      %174 = dma.vmem_to_hbm [thread:$0]  %s172, 128, %s5, [#allocation3]
    $region25: #{tpu_custom_call.1} parent=1 // pred_fallthru
      _
    // Predicated region
    $region26: #{tpu_custom_call.1} parent=1 // pred_check
      _
    $region27: #{tpu_custom_call.1} parent=1 // pred_check_branch
      %176 = sbr.rel (0) target = $region29
    $region28: #{tpu_custom_call.1} parent=1 // pred_region
      %177 = dma.done [#allocation3], 128
    $region29: #{tpu_custom_call.1} parent=1 // pred_fallthru
      _
    %178 = vsyncpa [#allocation3], 1

</llo_original>
